<compile_context>
chip_gen: v7x
topology: tpu7x:2x2x1
jax: 0.10.0
libtpu: 0.0.40
codegen_flags: <defaults>
</compile_context>

<pallas_src>
import functools

import jax
import jax.numpy as jnp
from jax.experimental import pallas as pl
from jax.experimental.pallas import tpu as pltpu


# ----------------------------------------------------------------------------
# Kernel
# ----------------------------------------------------------------------------
def _cva_kernel(x_ref, wq_ref, wv_ref, wo_ref, o_ref, xsum_ref, ctx_ref, *,
                batch_blk, seq_tile, embed, seq_total, compute_dtype):
    # x_ref : (Bb, st, E)   current sequence tile of the current batch block
    # wq_ref: (E, E)        q projection, (in, out) layout
    # wv_ref: (E, E)        v projection, (in, out) layout
    # wo_ref: (E, E)        output projection, (in, out) layout
    # o_ref : (Bb, st, E)
    # xsum_ref: (Bb, E) f32 scratch — running sum of x over the sequence
    # ctx_ref : (Bb, E) f32 scratch — ctx = mean(x) @ Wv
    phase = pl.program_id(1)
    t = pl.program_id(2)
    num_t = pl.num_programs(2)

    # ---- Phase 0: ctx = mean(x, seq) @ Wv (linearity of the mean) -----------
    @pl.when(phase == 0)
    def _ctx_phase():
        @pl.when(t == 0)
        def _init():
            xsum_ref[...] = jnp.zeros_like(xsum_ref)

        # Accumulate in f32 regardless of the x storage dtype (VPU/XLU path).
        xsum_ref[...] += jnp.sum(x_ref[...].astype(jnp.float32), axis=1)

        @pl.when(t == num_t - 1)
        def _finalize():
            mean_x = xsum_ref[...] * (1.0 / seq_total)                 # (Bb, E) f32
            ctx_ref[...] = jnp.dot(
                mean_x.astype(compute_dtype), wv_ref[...],
                preferred_element_type=jnp.float32)                    # (Bb, E) f32

    # ---- Phase 1: out = (x @ Wq * ctx) @ Wo, streamed over seq tiles --------
    @pl.when(phase == 1)
    def _out_phase():
        # Flatten (Bb, st, E) -> (Bb*st, E): one wide matmul instead of Bb
        # small ones.  st is chosen sublane-aligned so this is a free view.
        x2 = x_ref[...].astype(compute_dtype).reshape(batch_blk * seq_tile, embed)
        q = jnp.dot(x2, wq_ref[...],
                    preferred_element_type=jnp.float32)                # (Bb*st, E) f32
        # Gating stays in f32 (v5e VPU has no bf16).
        gated = q.reshape(batch_blk, seq_tile, embed) * ctx_ref[...][:, None, :]
        g2 = gated.astype(compute_dtype).reshape(batch_blk * seq_tile, embed)
        out = jnp.dot(g2, wo_ref[...],
                      preferred_element_type=jnp.float32)              # (Bb*st, E) f32
        o_ref[...] = out.reshape(batch_blk, seq_tile, embed).astype(o_ref.dtype)


# ----------------------------------------------------------------------------
# One-time weight preparation (hoisted out of the hot path)
# ----------------------------------------------------------------------------
def prepare_cva_weights(w_qv, w_out, *, compute_dtype=jnp.float32):
    """Split W_qv, transpose to (in, out) layout, cast to the MXU operand dtype.

    Accumulation inside the kernel is always f32 (preferred_element_type), so
    compute_dtype=jnp.bfloat16 only narrows the MXU operands / weight storage.
    """
    two_e, embed = w_qv.shape
    assert two_e == 2 * embed and w_out.shape == (embed, embed)
    wq_t = jnp.asarray(w_qv[:embed, :].T, dtype=compute_dtype)   # (E, E) q proj
    wv_t = jnp.asarray(w_qv[embed:, :].T, dtype=compute_dtype)   # (E, E) v proj
    wo_t = jnp.asarray(w_out.T, dtype=compute_dtype)             # (E, E) out proj
    return wq_t, wv_t, wo_t


# ----------------------------------------------------------------------------
# Tiling / VMEM heuristics (generation-aware)
# ----------------------------------------------------------------------------
_FALLBACK_VMEM_CAP = 64 * 1024 * 1024           # v7x-safe fallback
_DEFAULT_SCOPED_VMEM = 16 * 1024 * 1024         # conservative (v5e default)
_WEIGHT_SINGLE_BUFFER_THRESHOLD = 2 * 1024 * 1024


def _vmem_capacity_bytes():
    try:
        return int(pltpu.get_tpu_info().vmem_capacity_bytes)
    except Exception:
        return _FALLBACK_VMEM_CAP


def _divisors(n):
    return [d for d in range(1, n + 1) if n % d == 0]


def _pick_batch_block(batch):
    """Largest divisor of B giving >= 2 batch blocks (feeds v7x's 2 TCs)."""
    if batch <= 1:
        return max(batch, 1)
    for bb in range(batch // 2, 0, -1):
        if batch % bb == 0:
            return bb
    return 1


def _per_seq_row_bytes(bb, embed, x_itemsize, out_itemsize):
    # Per unit of seq_tile: double-buffered x + out tiles plus the f32
    # q / gated intermediates kept live inside the kernel.
    return bb * embed * (2 * x_itemsize + 2 * out_itemsize + 2 * 4)


def _weight_vmem_bytes(embed, w_itemsize, single_buffer):
    return 3 * embed * embed * w_itemsize * (1 if single_buffer else 2)


def _pick_seq_tile(seq, bb, embed, x_dtype, out_dtype, w_dtype,
                   single_buffer_weights, vmem_cap):
    x_it = jnp.dtype(x_dtype).itemsize
    o_it = jnp.dtype(out_dtype).itemsize
    w_it = jnp.dtype(w_dtype).itemsize
    budget = int(0.7 * vmem_cap)
    fixed = _weight_vmem_bytes(embed, w_it, single_buffer_weights) + 2 * bb * embed * 4
    avail = max(budget - fixed, 0)
    per_row = _per_seq_row_bytes(bb, embed, x_it, o_it)
    st_cap = max(avail // per_row, 1)

    # Sublane alignment so the (Bb, st, E) -> (Bb*st, E) flatten is a free view.
    align = 16 if x_it == 2 else 8
    divs = _divisors(seq)
    aligned = [d for d in divs if d % align == 0]
    cands = aligned if aligned else divs
    fitting = [d for d in cands if d <= st_cap]
    # Largest tile that fits the budget (prefers st == seq, i.e. a single pass
    # over x); if nothing fits, take the smallest legal tile (correct, slower).
    return max(fitting) if fitting else min(cands)


def _vmem_limit_bytes(bb, st, embed, x_dtype, out_dtype, w_dtype,
                      single_buffer_weights, vmem_cap):
    x_it = jnp.dtype(x_dtype).itemsize
    o_it = jnp.dtype(out_dtype).itemsize
    w_it = jnp.dtype(w_dtype).itemsize
    need = (st * _per_seq_row_bytes(bb, embed, x_it, o_it)
            + _weight_vmem_bytes(embed, w_it, single_buffer_weights)
            + 2 * bb * embed * 4)
    need = int(need * 1.25) + (1 << 20)          # headroom for compiler temps
    if need <= _DEFAULT_SCOPED_VMEM:
        return None                              # the default scoped limit is enough
    return min(need, int(0.95 * vmem_cap))


# ----------------------------------------------------------------------------
# Forward wrapper
# ----------------------------------------------------------------------------
def cva_forward(x, prepared_weights, *, seq_tile=None, batch_block=None,
                out_dtype=None):
    """x: (B, S, E); prepared_weights from prepare_cva_weights.

    Output dtype defaults to x.dtype, so a bf16 x also gets a bf16 output
    (halving both the x read and the output write HBM traffic).
    """
    wq, wv, wo = prepared_weights
    batch, seq, embed = x.shape
    assert wq.shape == (embed, embed) and wv.shape == (embed, embed)
    assert wo.shape == (embed, embed)
    cdtype = wq.dtype
    out_dtype = x.dtype if out_dtype is None else out_dtype

    vmem_cap = _vmem_capacity_bytes()
    # Single-buffer the grid-invariant weights once they matter for VMEM
    # (essential on v7x at large E; harmless elsewhere).
    single_buffer_weights = (
        3 * embed * embed * jnp.dtype(cdtype).itemsize
        > _WEIGHT_SINGLE_BUFFER_THRESHOLD)

    bb = _pick_batch_block(batch) if batch_block is None else batch_block
    assert batch % bb == 0, "batch_block must divide batch"
    st = (_pick_seq_tile(seq, bb, embed, x.dtype, out_dtype, cdtype,
                         single_buffer_weights, vmem_cap)
          if seq_tile is None else seq_tile)
    assert seq % st == 0, "seq_tile must divide the sequence length"
    num_t = seq // st

    kernel = functools.partial(
        _cva_kernel, batch_blk=bb, seq_tile=st, embed=embed,
        seq_total=seq, compute_dtype=cdtype)

    def _weight_spec():
        if single_buffer_weights:
            return pl.BlockSpec((embed, embed), lambda b, p, t: (0, 0),
                                pipeline_mode=pl.Buffered(1))
        return pl.BlockSpec((embed, embed), lambda b, p, t: (0, 0))

    cp_kwargs = dict(
        # Batch blocks are independent -> "parallel" (v7x megacore).  Phase and
        # seq-tile axes carry the xsum/ctx scratch dependency -> "arbitrary".
        dimension_semantics=("parallel", "arbitrary", "arbitrary"),
    )
    limit = _vmem_limit_bytes(bb, st, embed, x.dtype, out_dtype, cdtype,
                              single_buffer_weights, vmem_cap)
    if limit is not None:
        cp_kwargs["vmem_limit_bytes"] = limit

    out = pl.pallas_call(
        kernel,
        out_shape=jax.ShapeDtypeStruct((batch, seq, embed), out_dtype),
        grid_spec=pltpu.PrefetchScalarGridSpec(
            num_scalar_prefetch=0,
            grid=(batch // bb, 2, num_t),          # (batch block, phase, seq tile)
            in_specs=[
                pl.BlockSpec((bb, st, embed), lambda b, p, t: (b, t, 0)),
                _weight_spec(),                    # Wq
                _weight_spec(),                    # Wv
                _weight_spec(),                    # Wo
            ],
            # NOTE (intentional, see review): during phase 0 (p == 0) the output
            # block index is pinned at (b, 0, 0), so the un-written output
            # buffer is never flushed; phase 1 t == 0 fully overwrites it before
            # the first index change.  This relies on the phase/seq axes staying
            # sequential ("arbitrary") — do NOT mark them parallel or reorder
            # them.  With num_t == 1 the index is constant and the x block is
            # fetched from HBM exactly once (single-pass).
            out_specs=pl.BlockSpec((bb, st, embed), lambda b, p, t: (b, t * p, 0)),
            scratch_shapes=[
                pltpu.VMEM((bb, embed), jnp.float32),   # running sum of x over seq
                pltpu.VMEM((bb, embed), jnp.float32),   # ctx = mean(x) @ Wv
            ],
        ),
        compiler_params=pltpu.CompilerParams(**cp_kwargs),
    )(x, wq, wv, wo)
    return out


def composite_vector_attention(x, w_qv, w_out, *, compute_dtype=jnp.float32):
    """Convenience wrapper: per-call weight prep + forward."""
    return cva_forward(x, prepare_cva_weights(w_qv, w_out,
                                              compute_dtype=compute_dtype))


# ----------------------------------------------------------------------------
# Pure-JAX reference (matches the PyTorch forward exactly)
# ----------------------------------------------------------------------------
def _reference(x, w_qv, w_out):
    embed = x.shape[-1]
    qv = jnp.einsum("bse,oe->bso", x, w_qv)          # nn.Linear: x @ W^T
    q, v = qv[..., :embed], qv[..., embed:]
    ctx = jnp.mean(v, axis=1, keepdims=True)
    return jnp.einsum("bse,oe->bso", q * ctx, w_out)


if __name__ == "__main__":
    B, S, E = 2, 8, 32

    key = jax.random.PRNGKey(0)
    kx, kqv, ko = jax.random.split(key, 3)

    x = jax.random.normal(kx, (B, S, E), dtype=jnp.float32)
    # Deterministic nn.Linear-like uniform(-1/sqrt(E), 1/sqrt(E)) init.
    bound = 1.0 / (E ** 0.5)
    w_qv = jax.random.uniform(kqv, (2 * E, E), jnp.float32, -bound, bound)
    w_out = jax.random.uniform(ko, (E, E), jnp.float32, -bound, bound)

    ref = _reference(x, w_qv, w_out)

    # 1) f32 storage + f32 MXU operands (accumulation f32).  Tolerance allows
    #    for the TPU's default reduced-precision f32 matmul passes.
    params_f32 = prepare_cva_weights(w_qv, w_out, compute_dtype=jnp.float32)
    out = jax.block_until_ready(cva_forward(x, params_f32))
    assert out.shape == (B, S, E)
    assert jnp.allclose(out, ref, atol=3e-3, rtol=3e-3), "f32 mismatch vs reference"

    # 2) bf16 storage path: bf16 x, bf16 weights, bf16 output, f32 accumulation.
    params_bf16 = prepare_cva_weights(w_qv, w_out, compute_dtype=jnp.bfloat16)
    x_bf16 = x.astype(jnp.bfloat16)
    out_bf16 = jax.block_until_ready(cva_forward(x_bf16, params_bf16))
    assert out_bf16.shape == (B, S, E) and out_bf16.dtype == jnp.bfloat16
    assert jnp.allclose(out_bf16.astype(jnp.float32), ref, atol=3e-2, rtol=5e-2), \
        "bf16 mismatch vs reference"

    # 3) Multi-tile streamed path (num_t > 1) with a single batch block
    #    (exercises the 2-phase accumulation and the flattened multi-batch matmul).
    S2 = 64
    x2 = jax.random.normal(kx, (B, S2, E), dtype=jnp.float32)
    ref2 = _reference(x2, w_qv, w_out)
    out2 = jax.block_until_ready(
        cva_forward(x2, params_f32, seq_tile=16, batch_block=2))
    assert out2.shape == (B, S2, E)
    assert jnp.allclose(out2, ref2, atol=3e-3, rtol=3e-3), "tiled mismatch vs reference"

    print("KERNEL_OK")
</pallas_src>

<mosaic_0001>
module attributes {stable_mosaic.version = 11 : i64} {
  func.func @_cva_kernel(%arg0: i32, %arg1: i32, %arg2: i32, %arg3: memref<1x8x32xf32, #tpu.memory_space<vmem>>, %arg4: memref<32x32xf32, #tpu.memory_space<vmem>>, %arg5: memref<32x32xf32, #tpu.memory_space<vmem>>, %arg6: memref<32x32xf32, #tpu.memory_space<vmem>>, %arg7: memref<1x8x32xf32, #tpu.memory_space<vmem>>, %arg8: memref<1x32xf32, #tpu.memory_space<vmem>>, %arg9: memref<1x32xf32, #tpu.memory_space<vmem>>) attributes {dimension_semantics = [#tpu.dimension_semantics<parallel>, #tpu.dimension_semantics<arbitrary>, #tpu.dimension_semantics<arbitrary>], iteration_bounds = array<i64: 2, 2, 1>, scalar_prefetch = 0 : i64, scratch_operands = 2 : i64, tpu.core_type = #tpu.core_type<tc>, window_params = [{transform_indices = @transform_0, window_bounds = array<i64: 1, 8, 32>}, {pipeline_mode = #tpu.pipeline_mode<synchronous>, transform_indices = @transform_1, window_bounds = array<i64: 32, 32>}, {pipeline_mode = #tpu.pipeline_mode<synchronous>, transform_indices = @transform_2, window_bounds = array<i64: 32, 32>}, {pipeline_mode = #tpu.pipeline_mode<synchronous>, transform_indices = @transform_3, window_bounds = array<i64: 32, 32>}, {transform_indices = @transform_4, window_bounds = array<i64: 1, 8, 32>}]} {
    %c0_i32 = arith.constant 0 : i32
    %0 = arith.cmpi eq, %arg1, %c0_i32 : i32
    %1 = arith.extui %0 : i1 to i32
    %c0_i32_0 = arith.constant 0 : i32
    %2 = arith.cmpi ne, %1, %c0_i32_0 : i32
    scf.if %2 {
      %c0_i32_2 = arith.constant 0 : i32
      %6 = arith.cmpi eq, %arg2, %c0_i32_2 : i32
      %7 = arith.extui %6 : i1 to i32
      %c0_i32_3 = arith.constant 0 : i32
      %8 = arith.cmpi ne, %7, %c0_i32_3 : i32
      scf.if %8 {
        %cst_12 = arith.constant 0.000000e+00 : f32
        %17 = vector.broadcast %cst_12 : f32 to vector<1x32xf32>
        %c0_13 = arith.constant 0 : index
        %c0_14 = arith.constant 0 : index
        %18 = vector.load %arg8[%c0_13, %c0_14] : memref<1x32xf32, #tpu.memory_space<vmem>>, vector<1x32xf32>
        tpu.vector_store %arg8[%c0_13, %c0_14], %17 {strides = array<i32>} : memref<1x32xf32, #tpu.memory_space<vmem>>, vector<1x32xf32>,
      } else {
      }
      %c0 = arith.constant 0 : index
      %c0_4 = arith.constant 0 : index
      %9 = vector.load %arg8[%c0, %c0_4] : memref<1x32xf32, #tpu.memory_space<vmem>>, vector<1x32xf32>
      %c0_5 = arith.constant 0 : index
      %c0_6 = arith.constant 0 : index
      %c0_7 = arith.constant 0 : index
      %10 = vector.load %arg3[%c0_5, %c0_6, %c0_7] : memref<1x8x32xf32, #tpu.memory_space<vmem>>, vector<1x8x32xf32>
      %cst = arith.constant dense<0.000000e+00> : vector<1x32xf32>
      %11 = vector.multi_reduction <add>, %10, %cst [1] : vector<1x8x32xf32> to vector<1x32xf32>
      %12 = arith.addf %9, %11 : vector<1x32xf32>
      %c0_8 = arith.constant 0 : index
      %c0_9 = arith.constant 0 : index
      %13 = vector.load %arg8[%c0_8, %c0_9] : memref<1x32xf32, #tpu.memory_space<vmem>>, vector<1x32xf32>
      tpu.vector_store %arg8[%c0_8, %c0_9], %12 {strides = array<i32>} : memref<1x32xf32, #tpu.memory_space<vmem>>, vector<1x32xf32>,
      %c0_i32_10 = arith.constant 0 : i32
      %14 = arith.cmpi eq, %arg2, %c0_i32_10 : i32
      %15 = arith.extui %14 : i1 to i32
      %c0_i32_11 = arith.constant 0 : i32
      %16 = arith.cmpi ne, %15, %c0_i32_11 : i32
      scf.if %16 {
        %c0_12 = arith.constant 0 : index
        %c0_13 = arith.constant 0 : index
        %17 = vector.load %arg8[%c0_12, %c0_13] : memref<1x32xf32, #tpu.memory_space<vmem>>, vector<1x32xf32>
        %cst_14 = arith.constant 1.250000e-01 : f32
        %18 = vector.broadcast %cst_14 : f32 to vector<1x32xf32>
        %19 = arith.mulf %17, %18 : vector<1x32xf32>
        %c0_15 = arith.constant 0 : index
        %c0_16 = arith.constant 0 : index
        %20 = vector.load %arg5[%c0_15, %c0_16] : memref<32x32xf32, #tpu.memory_space<vmem>>, vector<32x32xf32>
        %cst_17 = arith.constant dense<0.000000e+00> : vector<1x32xf32>
        %21 = tpu.matmul %19, %20, %cst_17 {dimension_numbers = #tpu.dot_dimension_numbers<[1], [0], [0], [1], [0, 0, 1, 1], [], []>} : vector<1x32xf32>, vector<32x32xf32>, vector<1x32xf32> -> vector<1x32xf32>
        %c0_18 = arith.constant 0 : index
        %c0_19 = arith.constant 0 : index
        %22 = vector.load %arg9[%c0_18, %c0_19] : memref<1x32xf32, #tpu.memory_space<vmem>>, vector<1x32xf32>
        tpu.vector_store %arg9[%c0_18, %c0_19], %21 {strides = array<i32>} : memref<1x32xf32, #tpu.memory_space<vmem>>, vector<1x32xf32>,
      } else {
      }
    } else {
    }
    %c1_i32 = arith.constant 1 : i32
    %3 = arith.cmpi eq, %arg1, %c1_i32 : i32
    %4 = arith.extui %3 : i1 to i32
    %c0_i32_1 = arith.constant 0 : i32
    %5 = arith.cmpi ne, %4, %c0_i32_1 : i32
    scf.if %5 {
      %c0 = arith.constant 0 : index
      %c0_2 = arith.constant 0 : index
      %c0_3 = arith.constant 0 : index
      %6 = vector.load %arg3[%c0, %c0_2, %c0_3] : memref<1x8x32xf32, #tpu.memory_space<vmem>>, vector<1x8x32xf32>
      %7 = vector.shape_cast %6 : vector<1x8x32xf32> to vector<8x32xf32>
      %c0_4 = arith.constant 0 : index
      %c0_5 = arith.constant 0 : index
      %8 = vector.load %arg4[%c0_4, %c0_5] : memref<32x32xf32, #tpu.memory_space<vmem>>, vector<32x32xf32>
      %cst = arith.constant dense<0.000000e+00> : vector<8x32xf32>
      %9 = tpu.matmul %7, %8, %cst {dimension_numbers = #tpu.dot_dimension_numbers<[1], [0], [0], [1], [0, 0, 1, 1], [], []>} : vector<8x32xf32>, vector<32x32xf32>, vector<8x32xf32> -> vector<8x32xf32>
      %10 = vector.shape_cast %9 : vector<8x32xf32> to vector<1x8x32xf32>
      %c0_6 = arith.constant 0 : index
      %c0_7 = arith.constant 0 : index
      %11 = vector.load %arg9[%c0_6, %c0_7] : memref<1x32xf32, #tpu.memory_space<vmem>>, vector<1x32xf32>
      %12 = vector.shape_cast %11 : vector<1x32xf32> to vector<1x1x32xf32>
      %13 = vector.broadcast %12 : vector<1x1x32xf32> to vector<1x8x32xf32>
      %14 = arith.mulf %10, %13 : vector<1x8x32xf32>
      %15 = vector.shape_cast %14 : vector<1x8x32xf32> to vector<8x32xf32>
      %c0_8 = arith.constant 0 : index
      %c0_9 = arith.constant 0 : index
      %16 = vector.load %arg6[%c0_8, %c0_9] : memref<32x32xf32, #tpu.memory_space<vmem>>, vector<32x32xf32>
      %cst_10 = arith.constant dense<0.000000e+00> : vector<8x32xf32>
      %17 = tpu.matmul %15, %16, %cst_10 {dimension_numbers = #tpu.dot_dimension_numbers<[1], [0], [0], [1], [0, 0, 1, 1], [], []>} : vector<8x32xf32>, vector<32x32xf32>, vector<8x32xf32> -> vector<8x32xf32>
      %18 = vector.shape_cast %17 : vector<8x32xf32> to vector<1x8x32xf32>
      %c0_11 = arith.constant 0 : index
      %c0_12 = arith.constant 0 : index
      %c0_13 = arith.constant 0 : index
      %19 = vector.load %arg7[%c0_11, %c0_12, %c0_13] : memref<1x8x32xf32, #tpu.memory_space<vmem>>, vector<1x8x32xf32>
      tpu.vector_store %arg7[%c0_11, %c0_12, %c0_13], %18 {strides = array<i32>} : memref<1x8x32xf32, #tpu.memory_space<vmem>>, vector<1x8x32xf32>,
    } else {
    }
    return
  }
  func.func @transform_0(%arg0: i32, %arg1: i32, %arg2: i32) -> (i32, i32, i32) {
    %c0_i32 = arith.constant 0 : i32
    %c0_i32_0 = arith.constant 0 : i32
    return %arg0, %arg2, %c0_i32 : i32, i32, i32
  }
  func.func @transform_1(%arg0: i32, %arg1: i32, %arg2: i32) -> (i32, i32) {
    %c0_i32 = arith.constant 0 : i32
    %c0_i32_0 = arith.constant 0 : i32
    %c0_i32_1 = arith.constant 0 : i32
    return %c0_i32, %c0_i32_0 : i32, i32
  }
  func.func @transform_2(%arg0: i32, %arg1: i32, %arg2: i32) -> (i32, i32) {
    %c0_i32 = arith.constant 0 : i32
    %c0_i32_0 = arith.constant 0 : i32
    %c0_i32_1 = arith.constant 0 : i32
    return %c0_i32, %c0_i32_0 : i32, i32
  }
  func.func @transform_3(%arg0: i32, %arg1: i32, %arg2: i32) -> (i32, i32) {
    %c0_i32 = arith.constant 0 : i32
    %c0_i32_0 = arith.constant 0 : i32
    %c0_i32_1 = arith.constant 0 : i32
    return %c0_i32, %c0_i32_0 : i32, i32
  }
  func.func @transform_4(%arg0: i32, %arg1: i32, %arg2: i32) -> (i32, i32, i32) {
    %0 = arith.muli %arg2, %arg1 : i32
    %c0_i32 = arith.constant 0 : i32
    %c0_i32_0 = arith.constant 0 : i32
    return %arg0, %0, %c0_i32 : i32, i32, i32
  }
}

</mosaic_0001>

<llo_original>
// kernel: tpu_custom_call.1
$region0: #{tpu_custom_call.1}
  #allocation0 [shape = 'u32[]', space=smem, size = 0x4, offset = 0x4, fixed_abs, tag = 'smem constant byte address 0x4 - core index']
  #allocation1 [shape = 'u32[144,128]{1,0:T(1,128)}', space=vmem, size = 0x12000, scoped, tag = 'internal scratch']
  #allocation2 [shape = 'f32[1,32]{1,0:T(1,128)}', space=vmem, size = 0x200, scoped, tag = 'scratch operand']
  #allocation3 [shape = 'f32[1,32]{1,0:T(1,128)}', space=vmem, size = 0x200, scoped, tag = 'scratch operand']
  %s0 = inlined_call_operand.hbm [shape: f32[2,8,32], index: 0, kind: input, shape index: {}]
  %s1 = inlined_call_operand.hbm [shape: f32[32,32], index: 1, kind: input, shape index: {}]
  %s2 = inlined_call_operand.hbm [shape: f32[32,32], index: 2, kind: input, shape index: {}]
  %s3 = inlined_call_operand.hbm [shape: f32[32,32], index: 3, kind: input, shape index: {}]
  %s4 = inlined_call_operand.hbm [shape: f32[2,8,32], index: 4, kind: output, shape index: {}]
  %s5 = sld [smem:[#allocation0]]
  $region81: #{tpu_custom_call.1} parent=0
    _
  %s7 = ssub.s32 1, %s5
  %s8 = scalar_select 0, %s7, %s5
  $region1: #{tpu_custom_call.1} parent=0
    #allocation4 [shape = 'u8[8192]{0}', space=vmem, size = 0x2000, scoped, tag = 'input window, operand 0']
    #allocation5 [shape = 's32[2]{0}', space=sflag, size = 0x8, scoped, tag = 'scoped memory for tpu_custom_call.1']
    #allocation6 [shape = 's32[2]{0}', space=sflag, size = 0x8, scoped, tag = 'scoped memory for tpu_custom_call.1']
    #allocation7 [shape = 'u8[16384]{0}', space=vmem, size = 0x4000, scoped, tag = 'input window, operand 1, single buffered']
    #allocation8 [shape = 's32[1]{0}', space=sflag, size = 0x4, scoped, tag = 'scoped memory for tpu_custom_call.1']
    #allocation9 [shape = 'u8[16384]{0}', space=vmem, size = 0x4000, scoped, tag = 'input window, operand 2, single buffered']
    #allocation10 [shape = 'u8[16384]{0}', space=vmem, size = 0x4000, scoped, tag = 'input window, operand 3, single buffered']
    #allocation11 [shape = 's32[1]{0}', space=sflag, size = 0x4, scoped, tag = 'scoped memory for tpu_custom_call.1']
    #allocation12 [shape = 'u8[8192]{0}', space=vmem, size = 0x2000, scoped, tag = 'output window, operand 0']
    %9 = vsyncpa [#allocation5], 0
    %s10 = scalar_lea.sflag [#allocation5], 1
    %11 = vsyncpa %s10, 0
    %12 = vsyncpa [#allocation8], 0
    %13 = vsyncpa [#allocation11], 0
    %14 = vsyncpa [#allocation6], 0
    %s15 = scalar_lea.sflag [#allocation6], 1
    %16 = vsyncpa %s15, 0
    loop: start=0, step=1, limit=6
    $region2: #{tpu_custom_call.1} parent=1 // loop_pre_header
      _
    $region3: #{tpu_custom_call.1} parent=1 // loop_header
      %s18 = sphi 0, %s22
      %p19 = scmp.ge.s32.totalorder %s18, 6
      %s25 = sphi 0, %s44
      %s26 = sphi 0, %s40
      %s27 = sphi 0, %s36
      %s28 = sphi 0, %s25
      %s29 = sphi 0, %s26
      %s30 = sphi 0, %s27
      %s31 = sphi 0, %s28
      %s32 = sphi 0, %s29
      %s33 = sphi 0, %s30
      %s49 = sphi 0, %s51
      %s52 = sphi 0, %s49
      %s53 = sphi 0, %s52
      %s69 = sphi 0, %s53
      %s73 = sphi 0, %s73
      %s75 = sphi 0, %s73
      %s76 = sphi 0, %s75
      %s90 = sphi 0, %s76
      %s94 = sphi 0, %s94
      %s96 = sphi 0, %s94
      %s97 = sphi 0, %s96
      %s111 = sphi 0, %s97
      %s115 = sphi 0, %s115
      %s117 = sphi 0, %s115
      %s118 = sphi 0, %s117
      %s132 = sphi 0, %s118
      %s142 = sphi 0, %s144
      %s145 = sphi 0, %s142
      %s146 = sphi 0, %s145
      %s162 = sphi 0, %s146
    $region4: #{tpu_custom_call.1} parent=1 // loop_header_branch
      %21 = sbr.rel (%p19) target = $region8
    $region5: #{tpu_custom_call.1} parent=1 // loop_body
      %s23 = ssub.s32 %s18, 1
      %s24 = ssub.s32 %s18, 2
      %s34 = sadd.s32 1, %s27
      %p35 = scmp.ge.s32.totalorder %s34, 1
      %s36 = scalar_select %p35, 0, %s34
      %s37 = sadd.s32 1, %s26
      %s38 = scalar_select %p35, %s37, %s26
      %p39 = scmp.ge.s32.totalorder %s38, 2
      %s40 = scalar_select %p39, 0, %s38
      %s41 = sadd.s32 1, %s25
      %s42 = scalar_select %p39, %s41, %s25
      %p43 = scmp.ge.s32.totalorder %s42, 2
      %s44 = scalar_select %p43, 0, %s42
      %s45 = ssub.s32 %s25, %s44
      %s46 = ssub.s32 %s27, %s36
      %s47 = sor.u32 %s45, %s46
      %p48 = scmp.eq.s32.totalorder %s47, 0
      %s50 = sadd.s32 %s49, 1
      %s51 = scalar_select %p48, %s49, %s50
      %p54 = pneg %p48
      %p55 = scmp.eq.s32.totalorder %s18, 3
      %p56 = por %p54, %p55
      %p57 = scmp.ne.s32.totalorder %s49, %s52
      %p58 = scmp.eq.s32.totalorder %s18, 0
      %p59 = por %p57, %p58
      %p60 = scmp.ne.s32.totalorder %s49, %s52
      %p61 = scmp.eq.s32.totalorder %s23, 3
      %p62 = por %p60, %p61
      %p63 = scmp.ne.s32.totalorder %s52, %s53
      %p64 = scmp.eq.s32.totalorder %s23, 0
      %p65 = por %p63, %p64
      %p66 = scmp.ne.s32.totalorder %s52, %s53
      %p67 = scmp.eq.s32.totalorder %s24, 3
      %p68 = por %p66, %p67
      %p70 = scmp.ne.s32.totalorder %s53, %s69
      %p71 = scmp.eq.s32.totalorder %s24, 0
      %p72 = por %p70, %p71
      %s74 = sadd.s32 %s73, 1
      %p77 = scmp.eq.s32.totalorder %s18, 3
      %p78 = scmp.ne.s32.totalorder %s73, %s75
      %p79 = scmp.eq.s32.totalorder %s18, 0
      %p80 = por %p78, %p79
      %p81 = scmp.ne.s32.totalorder %s73, %s75
      %p82 = scmp.eq.s32.totalorder %s23, 3
      %p83 = por %p81, %p82
      %p84 = scmp.ne.s32.totalorder %s75, %s76
      %p85 = scmp.eq.s32.totalorder %s23, 0
      %p86 = por %p84, %p85
      %p87 = scmp.ne.s32.totalorder %s75, %s76
      %p88 = scmp.eq.s32.totalorder %s24, 3
      %p89 = por %p87, %p88
      %p91 = scmp.ne.s32.totalorder %s76, %s90
      %p92 = scmp.eq.s32.totalorder %s24, 0
      %p93 = por %p91, %p92
      %s95 = sadd.s32 %s94, 1
      %p98 = scmp.eq.s32.totalorder %s18, 3
      %p99 = scmp.ne.s32.totalorder %s94, %s96
      %p100 = scmp.eq.s32.totalorder %s18, 0
      %p101 = por %p99, %p100
      %p102 = scmp.ne.s32.totalorder %s94, %s96
      %p103 = scmp.eq.s32.totalorder %s23, 3
      %p104 = por %p102, %p103
      %p105 = scmp.ne.s32.totalorder %s96, %s97
      %p106 = scmp.eq.s32.totalorder %s23, 0
      %p107 = por %p105, %p106
      %p108 = scmp.ne.s32.totalorder %s96, %s97
      %p109 = scmp.eq.s32.totalorder %s24, 3
      %p110 = por %p108, %p109
      %p112 = scmp.ne.s32.totalorder %s97, %s111
      %p113 = scmp.eq.s32.totalorder %s24, 0
      %p114 = por %p112, %p113
      %s116 = sadd.s32 %s115, 1
      %p119 = scmp.eq.s32.totalorder %s18, 3
      %p120 = scmp.ne.s32.totalorder %s115, %s117
      %p121 = scmp.eq.s32.totalorder %s18, 0
      %p122 = por %p120, %p121
      %p123 = scmp.ne.s32.totalorder %s115, %s117
      %p124 = scmp.eq.s32.totalorder %s23, 3
      %p125 = por %p123, %p124
      %p126 = scmp.ne.s32.totalorder %s117, %s118
      %p127 = scmp.eq.s32.totalorder %s23, 0
      %p128 = por %p126, %p127
      %p129 = scmp.ne.s32.totalorder %s117, %s118
      %p130 = scmp.eq.s32.totalorder %s24, 3
      %p131 = por %p129, %p130
      %p133 = scmp.ne.s32.totalorder %s118, %s132
      %p134 = scmp.eq.s32.totalorder %s24, 0
      %p135 = por %p133, %p134
      %s136 = smul.u32 %s27, %s26
      %s137 = smul.u32 %s36, %s40
      %s138 = ssub.s32 %s25, %s44
      %s139 = ssub.s32 %s136, %s137
      %s140 = sor.u32 %s138, %s139
      %p141 = scmp.eq.s32.totalorder %s140, 0
      %s143 = sadd.s32 %s142, 1
      %s144 = scalar_select %p141, %s142, %s143
      %p147 = pneg %p141
      %p148 = scmp.eq.s32.totalorder %s18, 3
      %p149 = por %p147, %p148
      %p150 = scmp.ne.s32.totalorder %s142, %s145
      %p151 = scmp.eq.s32.totalorder %s18, 0
      %p152 = por %p150, %p151
      %p153 = scmp.ne.s32.totalorder %s142, %s145
      %p154 = scmp.eq.s32.totalorder %s23, 3
      %p155 = por %p153, %p154
      %p156 = scmp.ne.s32.totalorder %s145, %s146
      %p157 = scmp.eq.s32.totalorder %s23, 0
      %p158 = por %p156, %p157
      %p159 = scmp.ne.s32.totalorder %s145, %s146
      %p160 = scmp.eq.s32.totalorder %s24, 3
      %p161 = por %p159, %p160
      %p163 = scmp.ne.s32.totalorder %s146, %s162
      %p164 = scmp.eq.s32.totalorder %s24, 0
      %p165 = por %p163, %p164
      %p166 = scmp.le.s32.totalorder 1, %s18
      %p167 = scmp.lt.s32.totalorder %s18, 5
      %p168 = pnand %p166, %p167
      %p169 = pneg %p168
      // Predicated region
      $region9: #{tpu_custom_call.1} parent=5 // pred_check
        _
      $region10: #{tpu_custom_call.1} parent=5 // pred_check_branch
        %171 = sbr.rel (%p168) target = $region12
      $region11: #{tpu_custom_call.1} parent=5 // pred_region
        %s172 = ssub.s32 %s18, 1
        // Predicated region
        $region13: #{tpu_custom_call.1} parent=11 // pred_check
          %p173 = pneg %p86
        $region14: #{tpu_custom_call.1} parent=11 // pred_check_branch
          %175 = sbr.rel (%p173) target = $region16
        $region15: #{tpu_custom_call.1} parent=11 // pred_region
          %s177 = ssub.s32 512, 512
          %178 = vsyncadd [#allocation8], %s177
          %s179 = sshll.u32 [#allocation7], 4
          %s180 = int_to_ptr.vmem [resolvable:$true] %s179
          %185 = dma.hbm_to_vmem [thread:$0]  %s1, 512, %s180, [#allocation8], 128, 128, 8
        $region16: #{tpu_custom_call.1} parent=11 // pred_fallthru
          _
        // Predicated region
        $region17: #{tpu_custom_call.1} parent=11 // pred_check
          %p186 = pneg %p107
        $region18: #{tpu_custom_call.1} parent=11 // pred_check_branch
          %188 = sbr.rel (%p186) target = $region20
        $region19: #{tpu_custom_call.1} parent=11 // pred_region
          %s190 = ssub.s32 512, 512
          %191 = vsyncadd [#allocation8], %s190
          %s192 = sshll.u32 [#allocation9], 4
          %s193 = int_to_ptr.vmem [resolvable:$true] %s192
          %198 = dma.hbm_to_vmem [thread:$0]  %s2, 512, %s193, [#allocation8], 128, 128, 8
        $region20: #{tpu_custom_call.1} parent=11 // pred_fallthru
          _
        // Predicated region
        $region21: #{tpu_custom_call.1} parent=11 // pred_check
          %p199 = pneg %p128
        $region22: #{tpu_custom_call.1} parent=11 // pred_check_branch
          %201 = sbr.rel (%p199) target = $region24
        $region23: #{tpu_custom_call.1} parent=11 // pred_region
          %s203 = ssub.s32 512, 512
          %204 = vsyncadd [#allocation11], %s203
          %s205 = sshll.u32 [#allocation10], 4
          %s206 = int_to_ptr.vmem [resolvable:$true] %s205
          %211 = dma.hbm_to_vmem [thread:$0]  %s3, 512, %s206, [#allocation11], 128, 128, 8
        $region24: #{tpu_custom_call.1} parent=11 // pred_fallthru
          _
      $region12: #{tpu_custom_call.1} parent=5 // pred_fallthru
        _
      %p212 = scmp.lt.s32.totalorder %s18, 4
      // Predicated region
      $region25: #{tpu_custom_call.1} parent=5 // pred_check
        %p213 = pneg %p212
      $region26: #{tpu_custom_call.1} parent=5 // pred_check_branch
        %215 = sbr.rel (%p213) target = $region28
      $region27: #{tpu_custom_call.1} parent=5 // pred_region
        // Predicated region
        $region29: #{tpu_custom_call.1} parent=27 // pred_check
          %p216 = pneg %p59
        $region30: #{tpu_custom_call.1} parent=27 // pred_check_branch
          %218 = sbr.rel (%p216) target = $region32
        $region31: #{tpu_custom_call.1} parent=27 // pred_region
          %s219 = sand.u32 %s49, 1
          %s220 = scalar_lea.sflag [#allocation5], %s219
          %s221 = sand.u32 %s49, 1
          %s222 = smul.addr %s221, 8
          %s223 = scalar_lea.vmem [#allocation4], %s222
          %s225 = ssub.s32 128, 128
          %226 = vsyncadd %s220, %s225
          %s227 = sadd.s32 %s27, %s25
          %s228 = smul.addr %s227, 128
          %s229 = scalar_lea.hbm %s0, %s228
          %s231 = sshll.u32 %s223, 4
          %s232 = int_to_ptr.vmem [resolvable:$true] %s231
          %234 = dma.hbm_to_vmem [thread:$0]  %s229, 128, %s232, %s220
        $region32: #{tpu_custom_call.1} parent=27 // pred_fallthru
          _
      $region28: #{tpu_custom_call.1} parent=5 // pred_fallthru
        _
      %p235 = scmp.le.s32.totalorder 1, %s18
      %p236 = scmp.lt.s32.totalorder %s18, 5
      %p237 = pnand %p235, %p236
      %p238 = pneg %p237
      // Predicated region
      $region33: #{tpu_custom_call.1} parent=5 // pred_check
        _
      $region34: #{tpu_custom_call.1} parent=5 // pred_check_branch
        %240 = sbr.rel (%p237) target = $region36
      $region35: #{tpu_custom_call.1} parent=5 // pred_region
        %s241 = ssub.s32 %s18, 1
        %s242 = sand.u32 %s52, 1
        %s243 = scalar_lea.sflag [#allocation5], %s242
        %s244 = sand.u32 %s52, 1
        %s245 = smul.addr %s244, 8
        %s246 = scalar_lea.vmem [#allocation4], %s245
        // Predicated region
        $region37: #{tpu_custom_call.1} parent=35 // pred_check
          %p247 = pneg %p65
        $region38: #{tpu_custom_call.1} parent=35 // pred_check_branch
          %249 = sbr.rel (%p247) target = $region40
        $region39: #{tpu_custom_call.1} parent=35 // pred_region
          %250 = dma.done %s243, 128
        $region40: #{tpu_custom_call.1} parent=35 // pred_fallthru
          _
        // Predicated region
        $region41: #{tpu_custom_call.1} parent=35 // pred_check
          %p251 = pneg %p86
        $region42: #{tpu_custom_call.1} parent=35 // pred_check_branch
          %253 = sbr.rel (%p251) target = $region44
        $region43: #{tpu_custom_call.1} parent=35 // pred_region
          %254 = dma.done [#allocation8], 512
        $region44: #{tpu_custom_call.1} parent=35 // pred_fallthru
          _
        // Predicated region
        $region45: #{tpu_custom_call.1} parent=35 // pred_check
          %p255 = pneg %p107
        $region46: #{tpu_custom_call.1} parent=35 // pred_check_branch
          %257 = sbr.rel (%p255) target = $region48
        $region47: #{tpu_custom_call.1} parent=35 // pred_region
          %258 = dma.done [#allocation8], 512
        $region48: #{tpu_custom_call.1} parent=35 // pred_fallthru
          _
        // Predicated region
        $region49: #{tpu_custom_call.1} parent=35 // pred_check
          %p259 = pneg %p128
        $region50: #{tpu_custom_call.1} parent=35 // pred_check_branch
          %261 = sbr.rel (%p259) target = $region52
        $region51: #{tpu_custom_call.1} parent=35 // pred_region
          %262 = dma.done [#allocation11], 512
        $region52: #{tpu_custom_call.1} parent=35 // pred_fallthru
          _
        %s263 = sand.u32 %s52, 1
        %s264 = scalar_lea.sflag [#allocation5], %s263
        %s265 = sand.u32 %s52, 1
        %s266 = smul.addr %s265, 8
        %s267 = scalar_lea.vmem [#allocation4], %s266
        %p268 = pneg %p65
        %p269 = pneg %p62
        %p270 = pneg %p86
        %p271 = pneg %p83
        %p272 = pneg %p107
        %p273 = pneg %p104
        %p274 = pneg %p128
        %p275 = pneg %p125
        %p276 = pneg %p158
        %p277 = pneg %p155
        %s278 = sand.u32 %s145, 1
        %s279 = scalar_lea.sflag [#allocation6], %s278
        %s280 = sand.u32 %s145, 1
        %s281 = smul.addr %s280, 8
        %s282 = scalar_lea.vmem [#allocation12], %s281
        %s283 = smul.u32 %s30, %s29
        %p284 = scmp.eq.s32.totalorder %s29, 0
        // Predicated region
        $region53: #{tpu_custom_call.1} parent=35 // pred_check
          %p285 = pneg %p284
        $region54: #{tpu_custom_call.1} parent=35 // pred_check_branch
          %287 = sbr.rel (%p285) target = $region56
        $region55: #{tpu_custom_call.1} parent=35 // pred_region
          %p288 = scmp.eq.s32.totalorder %s30, 0
          // Predicated region
          $region57: #{tpu_custom_call.1} parent=55 // pred_check
            %p289 = pneg %p288
          $region58: #{tpu_custom_call.1} parent=55 // pred_check_branch
            %291 = sbr.rel (%p289) target = $region60
          $region59: #{tpu_custom_call.1} parent=55 // pred_region
            %vm292 = vcmask 253952
            %293 = vst.msk [vmem:[#allocation2] sm:$0x1] %vm292, 0.0
          $region60: #{tpu_custom_call.1} parent=55 // pred_fallthru
            _
          %v294 = vld [vmem:[#allocation2] sm:$0x1]
          %v295 = vld [vmem:[%s246] sm:$0xff]
          %vm296 = vcmask 261120
          %v297 = vsel %vm296, %v295, 0.0
          %v298 = vrot.slane %v297, 4
          %v299 = vadd.f32 %v297, %v298
          %v300 = vrot.slane %v299, 2
          %v301 = vadd.f32 %v299, %v300
          %v302 = vrot.slane %v301, 1
          %v303 = vadd.f32 %v301, %v302
          %v304 = vadd.f32 %v294, %v303
          %vm305 = vcmask 253952
          %306 = vst.msk [vmem:[#allocation2] sm:$0x1] %vm305, %v304
          // Predicated region
          $region61: #{tpu_custom_call.1} parent=55 // pred_check
            %p307 = pneg %p288
          $region62: #{tpu_custom_call.1} parent=55 // pred_check_branch
            %309 = sbr.rel (%p307) target = $region64
          $region63: #{tpu_custom_call.1} parent=55 // pred_region
            %v310 = vld [vmem:[#allocation2] sm:$0x1]
            %v311 = vmul.f32 %v310, 0.125
            %v312 = vld [vmem:[#allocation9] sm:$0xff]
            %v313 = vld [vmem:[#allocation9 + $0x8] sm:$0xff]
            %v314 = vld [vmem:[#allocation9 + $0x10] sm:$0xff]
            %v315 = vld [vmem:[#allocation9 + $0x18] sm:$0xff]
            %v317 = vsel %vm296, %v311, 0
            %319 = vmatprep.subr.mxu0 0.0
            %320 = vmatpush1.msra.mxu0 %v312
            %321 = vmatprep.subr.mxu0 0.0
            %322 = vmatpush1.msra.mxu0 %v313
            %323 = vmatprep.subr.mxu0 0.0
            %324 = vmatpush1.msra.mxu0 %v314
            %325 = vmatprep.subr.mxu0 0.0
            %326 = vmatpush1.msra.mxu0 %v315
            %327 = vmatprep.subr.mxu0 0.0
            %328 = vmatpush1.msra.mxu0 0.0
            %329 = vmatprep.subr.mxu0 0.0
            %330 = vmatpush1.msra.mxu0 0.0
            %331 = vmatprep.subr.mxu0 0.0
            %332 = vmatpush1.msra.mxu0 0.0
            %333 = vmatprep.subr.mxu0 0.0
            %334 = vmatpush1.msra.mxu0 0.0
            %335 = vmatprep.subr.mxu0 0.0
            %336 = vmatpush1.msra.mxu0 0.0
            %337 = vmatprep.subr.mxu0 0.0
            %338 = vmatpush1.msra.mxu0 0.0
            %339 = vmatprep.subr.mxu0 0.0
            %340 = vmatpush1.msra.mxu0 0.0
            %341 = vmatprep.subr.mxu0 0.0
            %342 = vmatpush1.msra.mxu0 0.0
            %343 = vmatprep.subr.mxu0 0.0
            %344 = vmatpush1.msra.mxu0 0.0
            %345 = vmatprep.subr.mxu0 0.0
            %346 = vmatpush1.msra.mxu0 0.0
            %347 = vmatprep.subr.mxu0 0.0
            %348 = vmatpush1.msra.mxu0 0.0
            %349 = vmatprep.subr.mxu0 0.0
            %350 = vmatpush1.msra.mxu0 0.0
            %351 = vmatprep.subr.mxu0 0.0
            %352 = vmatpush1.msra.mxu0 0.0
            %353 = vmatprep.subr.mxu0 0.0
            %354 = vmatpush1.msra.mxu0 0.0
            %355 = vmatprep.subr.mxu0 0.0
            %356 = vmatpush1.msra.mxu0 0.0
            %357 = vmatprep.subr.mxu0 0.0
            %358 = vmatpush1.msra.mxu0 0.0
            %359 = vmatprep.subr.mxu0 0.0
            %360 = vmatpush1.msra.mxu0 0.0
            %361 = vmatprep.subr.mxu0 0.0
            %362 = vmatpush1.msra.mxu0 0.0
            %363 = vmatprep.subr.mxu0 0.0
            %364 = vmatpush1.msra.mxu0 0.0
            %365 = vmatprep.subr.mxu0 0.0
            %366 = vmatpush1.msra.mxu0 0.0
            %367 = vmatprep.subr.mxu0 0.0
            %368 = vmatpush1.msra.mxu0 0.0
            %369 = vmatprep.subr.mxu0 0.0
            %370 = vmatpush1.msra.mxu0 0.0
            %371 = vmatprep.subr.mxu0 0.0
            %372 = vmatpush1.msra.mxu0 0.0
            %373 = vmatprep.subr.mxu0 0.0
            %374 = vmatpush1.msra.mxu0 0.0
            %375 = vmatprep.subr.mxu0 0.0
            %376 = vmatpush1.msra.mxu0 0.0
            %377 = vmatprep.subr.mxu0 0.0
            %378 = vmatpush1.msra.mxu0 0.0
            %379 = vmatprep.subr.mxu0 0.0
            %380 = vmatpush1.msra.mxu0 0.0
            %381 = vmatprep.subr.mxu0 0.0
            %382 = vmatpush1.msra.mxu0 0.0
            %383 = vmatprep.mubr.f32.mxu0 0.0
            %384 = vmatmul.mubr.f32.gmra.mrb[0].mxu0 %v317
            %v385 = vpop.f32.mrb[0].mxu0
            %v386 = vadd.f32 0.0, %v385
            %v387 = vpop.f32.mrb[0].mxu0
            %388 = vdwg.mxu0
            %389 = vst.msk [vmem:[#allocation3] sm:$0x1] %vm305, %v386
          $region64: #{tpu_custom_call.1} parent=55 // pred_fallthru
            _
        $region56: #{tpu_custom_call.1} parent=35 // pred_fallthru
          _
        %p390 = scmp.eq.s32.totalorder %s29, 1
        // Predicated region
        $region65: #{tpu_custom_call.1} parent=35 // pred_check
          %p391 = pneg %p390
        $region66: #{tpu_custom_call.1} parent=35 // pred_check_branch
          %393 = sbr.rel (%p391) target = $region68
        $region67: #{tpu_custom_call.1} parent=35 // pred_region
          %v394 = vld [vmem:[%s246] sm:$0xff]
          %v395 = vld [vmem:[#allocation7] sm:$0xff]
          %v396 = vld [vmem:[#allocation7 + $0x8] sm:$0xff]
          %v397 = vld [vmem:[#allocation7 + $0x10] sm:$0xff]
          %v398 = vld [vmem:[#allocation7 + $0x18] sm:$0xff]
          %vm399 = vcmask 261120
          %v401 = vsel %vm399, %v394, 0
          %403 = vmatprep.subr.mxu0 0.0
          %404 = vmatpush1.msra.mxu0 %v395
          %405 = vmatprep.subr.mxu0 0.0
          %406 = vmatpush1.msra.mxu0 %v396
          %407 = vmatprep.subr.mxu0 0.0
          %408 = vmatpush1.msra.mxu0 %v397
          %409 = vmatprep.subr.mxu0 0.0
          %410 = vmatpush1.msra.mxu0 %v398
          %411 = vmatprep.subr.mxu0 0.0
          %412 = vmatpush1.msra.mxu0 0.0
          %413 = vmatprep.subr.mxu0 0.0
          %414 = vmatpush1.msra.mxu0 0.0
          %415 = vmatprep.subr.mxu0 0.0
          %416 = vmatpush1.msra.mxu0 0.0
          %417 = vmatprep.subr.mxu0 0.0
          %418 = vmatpush1.msra.mxu0 0.0
          %419 = vmatprep.subr.mxu0 0.0
          %420 = vmatpush1.msra.mxu0 0.0
          %421 = vmatprep.subr.mxu0 0.0
          %422 = vmatpush1.msra.mxu0 0.0
          %423 = vmatprep.subr.mxu0 0.0
          %424 = vmatpush1.msra.mxu0 0.0
          %425 = vmatprep.subr.mxu0 0.0
          %426 = vmatpush1.msra.mxu0 0.0
          %427 = vmatprep.subr.mxu0 0.0
          %428 = vmatpush1.msra.mxu0 0.0
          %429 = vmatprep.subr.mxu0 0.0
          %430 = vmatpush1.msra.mxu0 0.0
          %431 = vmatprep.subr.mxu0 0.0
          %432 = vmatpush1.msra.mxu0 0.0
          %433 = vmatprep.subr.mxu0 0.0
          %434 = vmatpush1.msra.mxu0 0.0
          %435 = vmatprep.subr.mxu0 0.0
          %436 = vmatpush1.msra.mxu0 0.0
          %437 = vmatprep.subr.mxu0 0.0
          %438 = vmatpush1.msra.mxu0 0.0
          %439 = vmatprep.subr.mxu0 0.0
          %440 = vmatpush1.msra.mxu0 0.0
          %441 = vmatprep.subr.mxu0 0.0
          %442 = vmatpush1.msra.mxu0 0.0
          %443 = vmatprep.subr.mxu0 0.0
          %444 = vmatpush1.msra.mxu0 0.0
          %445 = vmatprep.subr.mxu0 0.0
          %446 = vmatpush1.msra.mxu0 0.0
          %447 = vmatprep.subr.mxu0 0.0
          %448 = vmatpush1.msra.mxu0 0.0
          %449 = vmatprep.subr.mxu0 0.0
          %450 = vmatpush1.msra.mxu0 0.0
          %451 = vmatprep.subr.mxu0 0.0
          %452 = vmatpush1.msra.mxu0 0.0
          %453 = vmatprep.subr.mxu0 0.0
          %454 = vmatpush1.msra.mxu0 0.0
          %455 = vmatprep.subr.mxu0 0.0
          %456 = vmatpush1.msra.mxu0 0.0
          %457 = vmatprep.subr.mxu0 0.0
          %458 = vmatpush1.msra.mxu0 0.0
          %459 = vmatprep.subr.mxu0 0.0
          %460 = vmatpush1.msra.mxu0 0.0
          %461 = vmatprep.subr.mxu0 0.0
          %462 = vmatpush1.msra.mxu0 0.0
          %463 = vmatprep.subr.mxu0 0.0
          %464 = vmatpush1.msra.mxu0 0.0
          %465 = vmatprep.subr.mxu0 0.0
          %466 = vmatpush1.msra.mxu0 0.0
          %467 = vmatprep.mubr.f32.mxu0 0.0
          %468 = vmatmul.mubr.f32.gmra.mrb[0].mxu0 %v401
          %v469 = vpop.f32.mrb[0].mxu0
          %v470 = vadd.f32 0.0, %v469
          %v471 = vpop.f32.mrb[0].mxu0
          %472 = vdwg.mxu0
          %v473 = vld [vmem:[#allocation3] sm:$0x1]
          %v475 = vlaneseq
          %v476 = vshrl.u32 %v475, 7
          %v477 = vsub.s32 0, %v476
          %v478 = vrot.slane %v473, %v477
          %v480 = vmul.f32 %v470, %v478
          %v481 = vld [vmem:[#allocation10] sm:$0xff]
          %v482 = vld [vmem:[#allocation10 + $0x8] sm:$0xff]
          %v483 = vld [vmem:[#allocation10 + $0x10] sm:$0xff]
          %v484 = vld [vmem:[#allocation10 + $0x18] sm:$0xff]
          %v486 = vsel %vm399, %v480, 0
          %488 = vmatprep.subr.mxu0 0.0
          %489 = vmatpush1.msra.mxu0 %v481
          %490 = vmatprep.subr.mxu0 0.0
          %491 = vmatpush1.msra.mxu0 %v482
          %492 = vmatprep.subr.mxu0 0.0
          %493 = vmatpush1.msra.mxu0 %v483
          %494 = vmatprep.subr.mxu0 0.0
          %495 = vmatpush1.msra.mxu0 %v484
          %496 = vmatprep.subr.mxu0 0.0
          %497 = vmatpush1.msra.mxu0 0.0
          %498 = vmatprep.subr.mxu0 0.0
          %499 = vmatpush1.msra.mxu0 0.0
          %500 = vmatprep.subr.mxu0 0.0
          %501 = vmatpush1.msra.mxu0 0.0
          %502 = vmatprep.subr.mxu0 0.0
          %503 = vmatpush1.msra.mxu0 0.0
          %504 = vmatprep.subr.mxu0 0.0
          %505 = vmatpush1.msra.mxu0 0.0
          %506 = vmatprep.subr.mxu0 0.0
          %507 = vmatpush1.msra.mxu0 0.0
          %508 = vmatprep.subr.mxu0 0.0
          %509 = vmatpush1.msra.mxu0 0.0
          %510 = vmatprep.subr.mxu0 0.0
          %511 = vmatpush1.msra.mxu0 0.0
          %512 = vmatprep.subr.mxu0 0.0
          %513 = vmatpush1.msra.mxu0 0.0
          %514 = vmatprep.subr.mxu0 0.0
          %515 = vmatpush1.msra.mxu0 0.0
          %516 = vmatprep.subr.mxu0 0.0
          %517 = vmatpush1.msra.mxu0 0.0
          %518 = vmatprep.subr.mxu0 0.0
          %519 = vmatpush1.msra.mxu0 0.0
          %520 = vmatprep.subr.mxu0 0.0
          %521 = vmatpush1.msra.mxu0 0.0
          %522 = vmatprep.subr.mxu0 0.0
          %523 = vmatpush1.msra.mxu0 0.0
          %524 = vmatprep.subr.mxu0 0.0
          %525 = vmatpush1.msra.mxu0 0.0
          %526 = vmatprep.subr.mxu0 0.0
          %527 = vmatpush1.msra.mxu0 0.0
          %528 = vmatprep.subr.mxu0 0.0
          %529 = vmatpush1.msra.mxu0 0.0
          %530 = vmatprep.subr.mxu0 0.0
          %531 = vmatpush1.msra.mxu0 0.0
          %532 = vmatprep.subr.mxu0 0.0
          %533 = vmatpush1.msra.mxu0 0.0
          %534 = vmatprep.subr.mxu0 0.0
          %535 = vmatpush1.msra.mxu0 0.0
          %536 = vmatprep.subr.mxu0 0.0
          %537 = vmatpush1.msra.mxu0 0.0
          %538 = vmatprep.subr.mxu0 0.0
          %539 = vmatpush1.msra.mxu0 0.0
          %540 = vmatprep.subr.mxu0 0.0
          %541 = vmatpush1.msra.mxu0 0.0
          %542 = vmatprep.subr.mxu0 0.0
          %543 = vmatpush1.msra.mxu0 0.0
          %544 = vmatprep.subr.mxu0 0.0
          %545 = vmatpush1.msra.mxu0 0.0
          %546 = vmatprep.subr.mxu0 0.0
          %547 = vmatpush1.msra.mxu0 0.0
          %548 = vmatprep.subr.mxu0 0.0
          %549 = vmatpush1.msra.mxu0 0.0
          %550 = vmatprep.subr.mxu0 0.0
          %551 = vmatpush1.msra.mxu0 0.0
          %552 = vmatprep.mubr.f32.mxu0 0.0
          %553 = vmatmul.mubr.f32.gmra.mrb[0].mxu0 %v486
          %v554 = vpop.f32.mrb[0].mxu0
          %v555 = vadd.f32 0.0, %v554
          %v556 = vpop.f32.mrb[0].mxu0
          %557 = vdwg.mxu0
          %558 = vst.msk [vmem:[%s282] sm:$0xff] %vm399, %v555
        $region68: #{tpu_custom_call.1} parent=35 // pred_fallthru
          _
        %s559 = sand.u32 %s145, 1
        %s560 = scalar_lea.sflag [#allocation6], %s559
        %s561 = sand.u32 %s145, 1
        %s562 = smul.addr %s561, 8
        %s563 = scalar_lea.vmem [#allocation12], %s562
        // Predicated region
        $region69: #{tpu_custom_call.1} parent=35 // pred_check
          %p564 = pneg %p155
        $region70: #{tpu_custom_call.1} parent=35 // pred_check_branch
          %566 = sbr.rel (%p564) target = $region72
        $region71: #{tpu_custom_call.1} parent=35 // pred_region
          %s567 = smul.u32 %s30, %s29
          %s569 = ssub.s32 128, 128
          %570 = vsyncadd %s560, %s569
          %s571 = sadd.s32 %s567, %s28
          %s572 = smul.addr %s571, 128
          %s573 = scalar_lea.hbm %s4, %s572
          %s575 = sshll.u32 %s563, 4
          %s576 = int_to_ptr.vmem [resolvable:$true] %s575
          %578 = dma.vmem_to_hbm [thread:$0]  %s576, 128, %s573, %s560
        $region72: #{tpu_custom_call.1} parent=35 // pred_fallthru
          _
      $region36: #{tpu_custom_call.1} parent=5 // pred_fallthru
        _
      %p579 = scmp.le.s32.totalorder 2, %s18
      // Predicated region
      $region73: #{tpu_custom_call.1} parent=5 // pred_check
        %p580 = pneg %p579
      $region74: #{tpu_custom_call.1} parent=5 // pred_check_branch
        %582 = sbr.rel (%p580) target = $region76
      $region75: #{tpu_custom_call.1} parent=5 // pred_region
        %s583 = ssub.s32 %s18, 2
        // Predicated region
        $region77: #{tpu_custom_call.1} parent=75 // pred_check
          %p584 = pneg %p161
        $region78: #{tpu_custom_call.1} parent=75 // pred_check_branch
          %586 = sbr.rel (%p584) target = $region80
        $region79: #{tpu_custom_call.1} parent=75 // pred_region
          %s587 = sand.u32 %s146, 1
          %s588 = scalar_lea.sflag [#allocation6], %s587
          %s589 = sand.u32 %s146, 1
          %s590 = smul.addr %s589, 8
          %s591 = scalar_lea.vmem [#allocation12], %s590
          %592 = dma.done %s588, 128
        $region80: #{tpu_custom_call.1} parent=75 // pred_fallthru
          _
      $region76: #{tpu_custom_call.1} parent=5 // pred_fallthru
        _
    $region6: #{tpu_custom_call.1} parent=1 // loop_footer
      %s22 = sadd.s32 1, %s18
    $region7: #{tpu_custom_call.1} parent=1 // loop_footer_branch
      %17 = sbr.rel target = $region3
    $region8: #{tpu_custom_call.1} parent=1 // loop_exit
      _
    %593 = vsyncpa [#allocation5], 1
    %s594 = scalar_lea.sflag [#allocation5], 1
    %595 = vsyncpa %s594, 1
    %596 = vsyncpa [#allocation8], 1
    %597 = vsyncpa [#allocation11], 1
    %598 = vsyncpa [#allocation6], 1
    %s599 = scalar_lea.sflag [#allocation6], 1
    %600 = vsyncpa %s599, 1

</llo_original>
